<compile_context>
chip_gen: v5e
topology: v5e:2x2
jax: 0.10.0
libtpu: 0.0.40
codegen_flags: <defaults>
</compile_context>

<pallas_src>
import jax
import jax.numpy as jnp
from jax.experimental import pallas as pl
from jax.experimental.pallas import tpu as pltpu


def _round_up(n: int, m: int) -> int:
    return ((n + m - 1) // m) * m


def _vmem_capacity_bytes(default: int = 64 * 1024 * 1024) -> int:
    """Per-TensorCore VMEM capacity (falls back to the v7x 64 MiB floor)."""
    try:
        info = pltpu.get_tpu_info()
        return int(getattr(info, "vmem_capacity_bytes", default))
    except Exception:
        return default


def _mlp_head_kernel(x_ref, w1_ref, b1_ref, w2_ref, b2_ref, o_ref):
    """One batch tile of: tanh(x @ W1 + b1) . w2 + b2, written lane-dense.

    x_ref : (TB, D3)   f32   activations (native dtype, cast in-kernel)
    w1_ref: (D3, D3p)  bf16  first-layer weight, resident across grid steps
    b1_ref: (1, D3p)   f32
    w2_ref: (1, D3p)   f32   second-layer weight as a row (padded cols are 0)
    b2_ref: (1, 1)     f32   scalar in SMEM
    o_ref : (1, 1, TB) f32   lane-dense output row for this tile
    """
    # Cast to bf16 right before the MXU (VPU op); f32 accumulation.
    x = x_ref[...].astype(jnp.bfloat16)                                  # (TB, D3)
    h = jnp.dot(x, w1_ref[...], preferred_element_type=jnp.float32)      # (TB, D3p)
    # Bias + tanh in f32 (VPU + EUP) -- correct on all generations.
    h = jnp.tanh(h + b1_ref[...])
    # Second linear as VPU multiply + lane reduce (XLU).
    o = jnp.sum(h * w2_ref[...], axis=-1)                                # (TB,)
    o = o + b2_ref[0, 0]
    # Relayout to a lane-dense (1, 1, TB) row -> unmasked vector stores.
    o_ref[...] = o.reshape(o_ref.shape).astype(o_ref.dtype)


def graph_depth_success_predictor(x, w1, b1, w2, b2, *, block_b: int = 1024):
    """Pallas forward pass.  x: (B, 3*dim) -> (B,)  (matches head(x).squeeze()).

    Weights are stored pre-transposed relative to nn.Linear:
      w1: (3d, 3d), b1: (1, 3d), w2: (3d, 1), b2: (1, 1).
    """
    B, D3 = x.shape
    assert w1.shape == (D3, D3) and b1.shape == (1, D3)
    assert w2.shape == (D3, 1) and b2.shape == (1, 1)

    D3p = _round_up(D3, 128)                       # lane-dense weight columns

    # ---- generation-aware VMEM budget ---------------------------------------
    vmem_cap = _vmem_capacity_bytes()
    vmem_budget = (vmem_cap // 8) * 7              # headroom for Mosaic scratch

    # Resident (constant-index) blocks are double-buffered by default.
    resident_bytes = 2 * (D3 * D3p * 2 + 2 * D3p * 4)          # W1 bf16 + b1/w2 f32
    # Per-batch-row cost: dbl-buffered f32 x row + in-kernel bf16 copy +
    # f32 hidden row (internal scratch) + dbl-buffered output element.
    per_row_bytes = 2 * (D3 * 4) + D3 * 2 + 2 * (D3p * 4) + 2 * 4
    tb_cap = (vmem_budget - resident_bytes - (1 << 20)) // per_row_bytes
    tb_cap = max(16, (tb_cap // 16) * 16)

    # ---- adaptive batch tile (multiple of 16, bounded padding waste) --------
    block_b = max(16, min(block_b, tb_cap))
    n_tiles = pl.cdiv(B, block_b)
    if n_tiles == 1 and B >= 256:
        n_tiles = 2                                # keep both v7x TCs busy
    TB = _round_up(pl.cdiv(B, n_tiles), 16)
    n_tiles = pl.cdiv(B, TB)
    B_pad = n_tiles * TB

    # ---- weights: tiny one-time pads / casts (activations untouched) --------
    w1_p = jnp.pad(w1.astype(jnp.bfloat16), ((0, 0), (0, D3p - D3)))
    b1_p = jnp.pad(b1.astype(jnp.float32), ((0, 0), (0, D3p - D3)))
    w2_row = jnp.pad(jnp.reshape(w2.astype(jnp.float32), (1, D3)),   # == w2.T
                     ((0, 0), (0, D3p - D3)))
    b2_s = jnp.reshape(b2.astype(jnp.float32), (1, 1))

    # Batch padding only when B is not a TB multiple (waste bounded by TB-1,
    # and < 16 rows for the adaptive TB above); no feature-dim pad, no cast.
    x_in = x if B_pad == B else jnp.pad(x, ((0, B_pad - B), (0, 0)))

    # ---- explicit VMEM limit --------------------------------------------------
    h_bytes = TB * D3p * 4
    tile_bytes = 2 * (TB * D3 * 4) + 2 * (TB * 4)
    need = resident_bytes + tile_bytes + 2 * h_bytes
    vmem_limit = int(min(vmem_budget, max(16 * 1024 * 1024, (need * 3) // 2)))

    out = pl.pallas_call(
        _mlp_head_kernel,
        out_shape=jax.ShapeDtypeStruct((n_tiles, 1, TB), jnp.float32),
        grid=(n_tiles,),
        in_specs=[
            pl.BlockSpec((TB, D3), lambda i: (i, 0)),           # x: tiled over batch
            pl.BlockSpec((D3, D3p), lambda i: (0, 0)),          # W1: resident
            pl.BlockSpec((1, D3p), lambda i: (0, 0)),           # b1: resident
            pl.BlockSpec((1, D3p), lambda i: (0, 0)),           # w2 row: resident
            pl.BlockSpec(memory_space=pltpu.MemorySpace.SMEM),  # b2 scalar
        ],
        out_specs=pl.BlockSpec((1, 1, TB), lambda i: (i, 0, 0)),
        compiler_params=pltpu.CompilerParams(
            # Batch tiles are independent -> parallel (megacore sharding on v7x).
            # TODO(synk): evaluate pltpu.CORE_PARALLEL here once profiled on v7x.
            dimension_semantics=("parallel",),
            vmem_limit_bytes=vmem_limit,
        ),
        cost_estimate=pl.CostEstimate(
            flops=2 * B_pad * D3 * D3p + 2 * B_pad * D3p,
            transcendentals=B_pad * D3p,
            bytes_accessed=(B_pad * D3 * 4          # x (f32, read once)
                            + D3 * D3p * 2          # W1 bf16
                            + 2 * D3p * 4 + 4       # b1, w2 row, b2
                            + B_pad * 4),           # output
        ),
    )(x_in, w1_p, b1_p, w2_row, b2_s)

    # Drop batch padding and apply the module's .squeeze() (glue, outside kernel).
    return jnp.squeeze(out.reshape(n_tiles * TB)[:B])


def init_params(key, dim, dtype=jnp.float32):
    """Deterministic init matching nn.Linear shapes (weights pre-transposed)."""
    d3 = dim * 3
    k1, k2, k3, k4 = jax.random.split(key, 4)
    bound = 1.0 / jnp.sqrt(d3)
    # PyTorch Linear weight is (out, in); we store (in, out) for x @ W.
    w1 = jax.random.uniform(k1, (d3, d3), dtype, -bound, bound)
    b1 = jax.random.uniform(k2, (1, d3), dtype, -bound, bound)
    w2 = jax.random.uniform(k3, (d3, 1), dtype, -bound, bound)
    b2 = jax.random.uniform(k4, (1, 1), dtype, -bound, bound)
    return w1, b1, w2, b2


if __name__ == "__main__":
    dim = 32          # module's `dim`; input feature size is dim * 3 = 96
    batch = 8

    key = jax.random.PRNGKey(0)
    kx, kp = jax.random.split(key)
    x = jax.random.normal(kx, (batch, dim * 3), jnp.float32)
    w1, b1, w2, b2 = init_params(kp, dim)

    y = graph_depth_success_predictor(x, w1, b1, w2, b2)
    y = jax.block_until_ready(y)

    # Plain-JAX f32 reference; kernel uses bf16 MXU operands, so tolerance is
    # widened relative to the all-f32 path.
    y_ref = jnp.squeeze(jnp.tanh(x @ w1 + b1) @ w2 + b2)
    assert y.shape == (batch,)
    assert jnp.allclose(y, y_ref, atol=2e-2, rtol=2e-2), (y, y_ref)

    print("KERNEL_OK")
</pallas_src>

<mosaic_0001>
module attributes {stable_mosaic.version = 11 : i64} {
  func.func @_mlp_head_kernel(%arg0: i32, %arg1: memref<16x96xf32, #tpu.memory_space<vmem>>, %arg2: memref<96x128xbf16, #tpu.memory_space<vmem>>, %arg3: memref<1x128xf32, #tpu.memory_space<vmem>>, %arg4: memref<1x128xf32, #tpu.memory_space<vmem>>, %arg5: memref<1x1xf32, #tpu.memory_space<smem>>, %arg6: memref<1x1x16xf32, #tpu.memory_space<vmem>>) attributes {dimension_semantics = [#tpu.dimension_semantics<parallel>], iteration_bounds = array<i64: 1>, scalar_prefetch = 0 : i64, scratch_operands = 0 : i64, tpu.core_type = #tpu.core_type<tc>, window_params = [{transform_indices = @transform_0, window_bounds = array<i64: 16, 96>}, {pipeline_mode = #tpu.pipeline_mode<synchronous>, transform_indices = @transform_1, window_bounds = array<i64: 96, 128>}, {pipeline_mode = #tpu.pipeline_mode<synchronous>, transform_indices = @transform_2, window_bounds = array<i64: 1, 128>}, {pipeline_mode = #tpu.pipeline_mode<synchronous>, transform_indices = @transform_3, window_bounds = array<i64: 1, 128>}, {transform_indices = @transform_4, window_bounds = array<i64: 1, 1>}, {transform_indices = @transform_5, window_bounds = array<i64: 1, 1, 16>}]} {
    %c0 = arith.constant 0 : index
    %c0_0 = arith.constant 0 : index
    %0 = vector.load %arg1[%c0, %c0_0] : memref<16x96xf32, #tpu.memory_space<vmem>>, vector<16x96xf32>
    %1 = arith.truncf %0 : vector<16x96xf32> to vector<16x96xbf16>
    %c0_1 = arith.constant 0 : index
    %c0_2 = arith.constant 0 : index
    %2 = vector.load %arg2[%c0_1, %c0_2] : memref<96x128xbf16, #tpu.memory_space<vmem>>, vector<96x128xbf16>
    %cst = arith.constant dense<0.000000e+00> : vector<16x128xf32>
    %3 = tpu.matmul %1, %2, %cst {dimension_numbers = #tpu.dot_dimension_numbers<[1], [0], [0], [1], [0, 0, 1, 1], [], []>} : vector<16x96xbf16>, vector<96x128xbf16>, vector<16x128xf32> -> vector<16x128xf32>
    %c0_3 = arith.constant 0 : index
    %c0_4 = arith.constant 0 : index
    %4 = vector.load %arg3[%c0_3, %c0_4] : memref<1x128xf32, #tpu.memory_space<vmem>>, vector<1x128xf32>
    %5 = vector.broadcast %4 : vector<1x128xf32> to vector<16x128xf32>
    %6 = arith.addf %3, %5 : vector<16x128xf32>
    %7 = math.tanh %6 : vector<16x128xf32>
    %c0_5 = arith.constant 0 : index
    %c0_6 = arith.constant 0 : index
    %8 = vector.load %arg4[%c0_5, %c0_6] : memref<1x128xf32, #tpu.memory_space<vmem>>, vector<1x128xf32>
    %9 = vector.broadcast %8 : vector<1x128xf32> to vector<16x128xf32>
    %10 = arith.mulf %7, %9 : vector<16x128xf32>
    %cst_7 = arith.constant dense<0.000000e+00> : vector<16xf32>
    %11 = vector.multi_reduction <add>, %10, %cst_7 [1] : vector<16x128xf32> to vector<16xf32>
    %c0_8 = arith.constant 0 : index
    %c0_9 = arith.constant 0 : index
    %12 = memref.load %arg5[%c0_8, %c0_9] : memref<1x1xf32, #tpu.memory_space<smem>>
    %13 = vector.broadcast %12 : f32 to vector<16xf32>
    %14 = arith.addf %11, %13 : vector<16xf32>
    %15 = vector.shape_cast %14 : vector<16xf32> to vector<1x1x16xf32>
    %c0_10 = arith.constant 0 : index
    %c0_11 = arith.constant 0 : index
    %c0_12 = arith.constant 0 : index
    %16 = vector.load %arg6[%c0_10, %c0_11, %c0_12] : memref<1x1x16xf32, #tpu.memory_space<vmem>>, vector<1x1x16xf32>
    tpu.vector_store %arg6[%c0_10, %c0_11, %c0_12], %15 {strides = array<i32>} : memref<1x1x16xf32, #tpu.memory_space<vmem>>, vector<1x1x16xf32>,
    return
  }
  func.func @transform_0(%arg0: i32) -> (i32, i32) {
    %c0_i32 = arith.constant 0 : i32
    %c0_i32_0 = arith.constant 0 : i32
    return %arg0, %c0_i32 : i32, i32
  }
  func.func @transform_1(%arg0: i32) -> (i32, i32) {
    %c0_i32 = arith.constant 0 : i32
    %c0_i32_0 = arith.constant 0 : i32
    %c0_i32_1 = arith.constant 0 : i32
    return %c0_i32, %c0_i32_0 : i32, i32
  }
  func.func @transform_2(%arg0: i32) -> (i32, i32) {
    %c0_i32 = arith.constant 0 : i32
    %c0_i32_0 = arith.constant 0 : i32
    %c0_i32_1 = arith.constant 0 : i32
    return %c0_i32, %c0_i32_0 : i32, i32
  }
  func.func @transform_3(%arg0: i32) -> (i32, i32) {
    %c0_i32 = arith.constant 0 : i32
    %c0_i32_0 = arith.constant 0 : i32
    %c0_i32_1 = arith.constant 0 : i32
    return %c0_i32, %c0_i32_0 : i32, i32
  }
  func.func @transform_4(%arg0: i32) -> (i32, i32) {
    %c0_i32 = arith.constant 0 : i32
    %c0_i32_0 = arith.constant 0 : i32
    %c0_i32_1 = arith.constant 0 : i32
    return %c0_i32, %c0_i32_0 : i32, i32
  }
  func.func @transform_5(%arg0: i32) -> (i32, i32, i32) {
    %c0_i32 = arith.constant 0 : i32
    %c0_i32_0 = arith.constant 0 : i32
    %c0_i32_1 = arith.constant 0 : i32
    return %arg0, %c0_i32, %c0_i32_0 : i32, i32, i32
  }
}

</mosaic_0001>

<llo_original>
// kernel: tpu_custom_call.1
$region0: #{tpu_custom_call.1}
  #allocation0 [shape = 'u32[]', space=smem, size = 0x4, offset = 0x4, fixed_abs, tag = 'smem constant byte address 0x4 - core index']
  #allocation1 [shape = 'u32[72,128]{1,0:T(1,128)}', space=vmem, size = 0x9000, scoped, tag = 'internal scratch']
  #allocation2 [shape = 'f32[1,1]{1,0:T(1,128)S(6)}', space=smem, size = 0x200, scoped, tag = 'scoped memory for tpu_custom_call.1']
  %s0 = inlined_call_operand.hbm [shape: f32[16,96], index: 0, kind: input, shape index: {}]
  %s1 = inlined_call_operand.hbm [shape: bf16[96,128], index: 1, kind: input, shape index: {}]
  %s2 = inlined_call_operand.vmem [shape: f32[1,128], index: 2, kind: input, shape index: {}]
  %s3 = inlined_call_operand.vmem [shape: f32[1,128], index: 3, kind: input, shape index: {}]
  %s4 = inlined_call_operand.<no memory space> [shape: f32[1,1], index: 4, kind: input, shape index: {}]
  %s5 = inlined_call_operand.hbm [shape: f32[1,1,16], index: 5, kind: output, shape index: {}]
  %s6 = sld [smem:[#allocation0]]
  $region38: #{tpu_custom_call.1} parent=0
    _
  %s8 = ssub.s32 1, %s6
  %s9 = scalar_select 0, %s8, %s6
  %10 = sst [smem:[#allocation2]] %s4
  $region1: #{tpu_custom_call.1} parent=0
    #allocation3 [shape = 'u8[8192]{0}', space=vmem, size = 0x2000, scoped, tag = 'input window, operand 0, single buffered']
    #allocation4 [shape = 's32[1]{0}', space=sflag, size = 0x4, scoped, tag = 'scoped memory for tpu_custom_call.1']
    #allocation5 [shape = 's32[1]{0}', space=sflag, size = 0x4, scoped, tag = 'scoped memory for tpu_custom_call.1']
    #allocation6 [shape = 'u8[24576]{0}', space=vmem, size = 0x6000, scoped, tag = 'input window, operand 1, single buffered']
    #allocation7 [shape = 's32[1]{0}', space=sflag, size = 0x4, scoped, tag = 'scoped memory for tpu_custom_call.1']
    #allocation8 [shape = 'u8[512]{0}', space=vmem, size = 0x400, scoped, tag = 'output window, operand 0, single buffered']
    %11 = vsyncpa [#allocation4], 0
    %12 = vsyncpa [#allocation7], 0
    %13 = vsyncpa [#allocation5], 0
    // Predicated region
    $region2: #{tpu_custom_call.1} parent=1 // pred_check
      _
    $region3: #{tpu_custom_call.1} parent=1 // pred_check_branch
      %15 = sbr.rel (0) target = $region5
    $region4: #{tpu_custom_call.1} parent=1 // pred_region
      %17 = vsyncadd [#allocation4], 0
      %s18 = sshll.u32 %s0, 4
      %s19 = int_to_ptr.hbm [resolvable:$true] %s18
      %s20 = sshll.u32 [#allocation3], 4
      %s21 = int_to_ptr.vmem [resolvable:$true] %s20
      %26 = dma.hbm_to_vmem [thread:$0]  %s19, 256, %s21, [#allocation4], 128, 128, 8
    $region5: #{tpu_custom_call.1} parent=1 // pred_fallthru
      _
    // Predicated region
    $region6: #{tpu_custom_call.1} parent=1 // pred_check
      _
    $region7: #{tpu_custom_call.1} parent=1 // pred_check_branch
      %28 = sbr.rel (0) target = $region9
    $region8: #{tpu_custom_call.1} parent=1 // pred_region
      %30 = vsyncadd [#allocation7], 0
      %s31 = sshll.u32 %s1, 4
      %s32 = int_to_ptr.hbm [resolvable:$true] %s31
      %s33 = sshll.u32 [#allocation6], 4
      %s34 = int_to_ptr.vmem [resolvable:$true] %s33
      %39 = dma.hbm_to_vmem [thread:$0]  %s32, 768, %s34, [#allocation7], 64, 64, 4
    $region9: #{tpu_custom_call.1} parent=1 // pred_fallthru
      _
    // Predicated region
    $region10: #{tpu_custom_call.1} parent=1 // pred_check
      _
    $region11: #{tpu_custom_call.1} parent=1 // pred_check_branch
      %41 = sbr.rel (0) target = $region13
    $region12: #{tpu_custom_call.1} parent=1 // pred_region
      _
    $region13: #{tpu_custom_call.1} parent=1 // pred_fallthru
      _
    // Predicated region
    $region14: #{tpu_custom_call.1} parent=1 // pred_check
      _
    $region15: #{tpu_custom_call.1} parent=1 // pred_check_branch
      %43 = sbr.rel (0) target = $region17
    $region16: #{tpu_custom_call.1} parent=1 // pred_region
      _
    $region17: #{tpu_custom_call.1} parent=1 // pred_fallthru
      _
    // Predicated region
    $region18: #{tpu_custom_call.1} parent=1 // pred_check
      _
    $region19: #{tpu_custom_call.1} parent=1 // pred_check_branch
      %45 = sbr.rel (0) target = $region21
    $region20: #{tpu_custom_call.1} parent=1 // pred_region
      _
    $region21: #{tpu_custom_call.1} parent=1 // pred_fallthru
      _
    // Predicated region
    $region22: #{tpu_custom_call.1} parent=1 // pred_check
      _
    $region23: #{tpu_custom_call.1} parent=1 // pred_check_branch
      %47 = sbr.rel (0) target = $region25
    $region24: #{tpu_custom_call.1} parent=1 // pred_region
      %49 = dma.done [#allocation4], 256
    $region25: #{tpu_custom_call.1} parent=1 // pred_fallthru
      _
    // Predicated region
    $region26: #{tpu_custom_call.1} parent=1 // pred_check
      _
    $region27: #{tpu_custom_call.1} parent=1 // pred_check_branch
      %51 = sbr.rel (0) target = $region29
    $region28: #{tpu_custom_call.1} parent=1 // pred_region
      %53 = dma.done [#allocation7], 768
    $region29: #{tpu_custom_call.1} parent=1 // pred_fallthru
      _
    %v55 = vld [vmem:[#allocation3] sm:$0xff]
    %v56 = vld [vmem:[#allocation3 + $0x8] sm:$0xff]
    %v57 = vpack.c.bf16 %v56, %v55
    %v58 = vld [vmem:[#allocation6] sm:$0xf]
    %v59 = vld [vmem:[#allocation6 + $0x4] sm:$0xf]
    %v60 = vld [vmem:[#allocation6 + $0x8] sm:$0xf]
    %v61 = vld [vmem:[#allocation6 + $0xc] sm:$0xf]
    %v62 = vld [vmem:[#allocation6 + $0x10] sm:$0xf]
    %v63 = vld [vmem:[#allocation6 + $0x14] sm:$0xf]
    %v64 = vld [vmem:[#allocation6 + $0x18] sm:$0xf]
    %v65 = vld [vmem:[#allocation6 + $0x1c] sm:$0xf]
    %v66 = vld [vmem:[#allocation6 + $0x20] sm:$0xf]
    %v67 = vld [vmem:[#allocation6 + $0x24] sm:$0xf]
    %v68 = vld [vmem:[#allocation6 + $0x28] sm:$0xf]
    %v69 = vld [vmem:[#allocation6 + $0x2c] sm:$0xf]
    %v70 = vld [vmem:[%s2] sm:$0x1]
    %v72 = vperm.slane %v70, 0
    %v86 = vunpack.c.l.b16 %v58
    %v87 = vunpack.c.l.b16 %v59
    %v88 = vunpack.c.l.b16 %v60
    %v89 = vunpack.c.l.b16 %v61
    %v90 = vunpack.c.l.b16 %v62
    %v91 = vunpack.c.l.b16 %v63
    %v92 = vunpack.c.l.b16 %v64
    %v93 = vunpack.c.l.b16 %v65
    %v94 = vunpack.c.l.b16 %v66
    %v95 = vunpack.c.l.b16 %v67
    %v96 = vunpack.c.l.b16 %v68
    %v97 = vunpack.c.l.b16 %v69
    %v98 = vpack.c.b16 %v87, %v86
    %v99 = vpack.c.b16 %v89, %v88
    %v100 = vpack.c.b16 %v91, %v90
    %v101 = vpack.c.b16 %v93, %v92
    %v102 = vpack.c.b16 %v95, %v94
    %v103 = vpack.c.b16 %v97, %v96
    %vm110 = vcmask 785408
    %v112 = vsel %vm110, %v57, 0
    %114 = vmatpush.bf16.msra.mxu0 0
    %115 = vmatpush.bf16.msra.mxu0 0
    %116 = vmatpush.bf16.msra.mxu0 %v103
    %117 = vmatpush.bf16.msra.mxu0 %v102
    %118 = vmatpush.bf16.msra.mxu0 %v101
    %119 = vmatpush.bf16.msra.mxu0 %v100
    %120 = vmatpush.bf16.msra.mxu0 %v99
    %121 = vmatpush.bf16.msra.mxu0 %v98
    %122 = vmatmul.bf16.gmra.mxu0 %v112
    %v123 = vpop.f32.mrf.mxu0
    %v124 = vadd.f32 %v72, %v123
    %v125 = vpop.f32.mrf.mxu0
    %v126 = vadd.f32 %v72, %v125
    %127 = vdwg.mxu0
    %v128 = vtanh.pop %v124
    %v129 = vtanh.pop %v126
    %v130 = vld [vmem:[%s3] sm:$0x1]
    %v132 = vperm.slane %v130, 0
    %v134 = vmul.f32 %v128, %v132
    %v135 = vmul.f32 %v129, %v132
    %136 = vadd.xlane.f32.xlu0 %v134
    %v137 = vpop.xlane.xlu0 %136
    %138 = vadd.xlane.f32.xlu0 %v135
    %v139 = vpop.xlane.xlu0 %138
    %s140 = sld [smem:[#allocation2]]
    %v141 = vstv %s140
    %v142 = vadd.f32 %v137, %v141
    %v143 = vadd.f32 %v139, %v141
    %v146 = vlaneseq
    %v147 = vand.u32 %v146, 127
    %v148 = vperm.slane %v142, %v147
    %v149 = vadd.s32 %v147, 4294967288
    %v150 = vperm.slane %v143, %v149
    %vm151 = vcmask 130112
    %v152 = vsel %vm151, %v150, %v148
    %vm154 = vcmask 122880
    %155 = vst.msk [vmem:[#allocation8] sm:$0x1] %vm154, %v152
    // Predicated region
    $region30: #{tpu_custom_call.1} parent=1 // pred_check
      _
    $region31: #{tpu_custom_call.1} parent=1 // pred_check_branch
      %157 = sbr.rel (0) target = $region33
    $region32: #{tpu_custom_call.1} parent=1 // pred_region
      %159 = vsyncadd [#allocation5], 0
      %s161 = sshll.u32 [#allocation8], 4
      %s162 = int_to_ptr.vmem [resolvable:$true] %s161
      %s163 = sshll.u32 %s5, 4
      %s164 = int_to_ptr.hbm [resolvable:$true] %s163
      %166 = dma.vmem_to_hbm [thread:$0]  %s162, 16, %s164, [#allocation5]
    $region33: #{tpu_custom_call.1} parent=1 // pred_fallthru
      _
    // Predicated region
    $region34: #{tpu_custom_call.1} parent=1 // pred_check
      _
    $region35: #{tpu_custom_call.1} parent=1 // pred_check_branch
      %168 = sbr.rel (0) target = $region37
    $region36: #{tpu_custom_call.1} parent=1 // pred_region
      %170 = dma.done [#allocation5], 16
    $region37: #{tpu_custom_call.1} parent=1 // pred_fallthru
      _
    %171 = vsyncpa [#allocation4], 1
    %172 = vsyncpa [#allocation7], 1
    %173 = vsyncpa [#allocation5], 1

</llo_original>
